<compile_context>
chip_gen: v5e
topology: v5e:2x2
jax: 0.10.0
libtpu: 0.0.40
codegen_flags: <defaults>
</compile_context>

<pallas_src>
import jax
import jax.numpy as jnp
from jax.experimental import pallas as pl
from jax.experimental.pallas import tpu as pltpu

LANES = 128
DEFAULT_TILE_ROWS = 1024      # 512 KiB per f32 input stream per grid step
SENTINEL = -50.0              # sigmoid(-50) ~ 1.9e-22, log1p(exp(-50)) ~ 1.9e-22 -> negligible
SMOOTH = 1e-5                 # SoftDiceLoss default


def _round_up(a, m):
    return (a + m - 1) // m * m


def _loss_kernel(x_ref, t_ref, acc_ref):
    """acc_ref: (4, 8, 128) f32 resident accumulator holding per-core partial sums of
       [bce, sigmoid*target, sigmoid, target]."""
    @pl.when(pl.program_id(1) == 0)
    def _():
        acc_ref[...] = jnp.zeros_like(acc_ref)

    x = x_ref[...].astype(jnp.float32)
    t = t_ref[...].astype(jnp.float32)

    # Stable BCEWithLogits: max(x,0) - x*t + log1p(exp(-|x|)); sigmoid reuses the same exp.
    s = jnp.exp(-jnp.abs(x))                       # single EUP exp, reused twice
    bce = jnp.maximum(x, 0.0) - x * t + jnp.log1p(s)
    inv = pl.reciprocal(1.0 + s, approx=True)      # EUP vrcp instead of a full divide
    p = jnp.where(x >= 0.0, inv, s * inv)          # == sigmoid(x)

    def _fold(v):
        # (R,128) -> (8,128): each (8,128) slice along axis 0 is one native vreg tile,
        # so this is pure VALU adds (no cross-lane traffic) and keeps the accumulator
        # read-modify-write tiny.
        r = v.shape[0]
        return jnp.sum(v.reshape(r // 8, 8, LANES), axis=0)

    acc_ref[0, :, :] += _fold(bce)
    acc_ref[1, :, :] += _fold(p * t)
    acc_ref[2, :, :] += _fold(p)
    acc_ref[3, :, :] += _fold(t)


def dc_and_bce_loss(net_output, target, smooth=SMOOTH,
                    tile_rows=DEFAULT_TILE_ROWS, num_cores=2):
    """JAX/Pallas equivalent of DC_and_BCE_loss(reduction='sum').forward (NCDHW inputs)."""
    assert net_output.shape == target.shape
    n = net_output.size

    rows = -(-n // LANES)
    tile_rows = _round_up(max(8, min(tile_rows, _round_up(rows, 8))), 8)
    blocks_total = -(-rows // tile_rows)
    n_cores = num_cores if blocks_total >= num_cores else 1
    blocks_per_core = -(-blocks_total // n_cores)
    padded_rows = n_cores * blocks_per_core * tile_rows
    pad = padded_rows * LANES - n

    # Keep the network's native dtype (no wrapper astype); cast happens in-kernel.
    xf = net_output.reshape(-1)
    tf = target.reshape(-1)
    if pad:
        # Sentinel padding replaces the third (mask) HBM stream: contributes exactly 0 to
        # sum(p*t)/sum(t) and ~1e-22/elem to bce/sum(p).
        # TODO(synk): handle the ragged tail separately in production to avoid this
        # full-array pad copy (only hit when n is not already block-aligned).
        xf = jnp.pad(xf, (0, pad), constant_values=SENTINEL)
        tf = jnp.pad(tf, (0, pad), constant_values=0)
    x2 = xf.reshape(padded_rows, LANES)
    t2 = tf.reshape(padded_rows, LANES)

    in_spec = pl.BlockSpec(
        (tile_rows, LANES),
        lambda c, i, _b=blocks_per_core: (c * _b + i, 0))
    out_spec = pl.BlockSpec((None, 4, 8, LANES), lambda c, i: (c, 0, 0, 0))

    acc = pl.pallas_call(
        _loss_kernel,
        out_shape=jax.ShapeDtypeStruct((n_cores, 4, 8, LANES), jnp.float32),
        grid_spec=pltpu.PrefetchScalarGridSpec(
            num_scalar_prefetch=0,
            grid=(n_cores, blocks_per_core),
            in_specs=[in_spec, in_spec],
            out_specs=out_spec,
        ),
        compiler_params=pltpu.CompilerParams(
            dimension_semantics=("parallel", "arbitrary")),
    )(x2, t2)

    sums = jnp.sum(acc, axis=(0, 2, 3))
    bce_sum, sum_pt, sum_p, sum_t = sums[0], sums[1], sums[2], sums[3]

    # SoftDiceLoss(batch_dice=True): torch.sum(2*ps*gt + smooth) reduces over ALL dims,
    # so the numerator carries smooth * n_elements; the loss contribution is -dice.
    dice = (2.0 * sum_pt + smooth * jnp.float32(n)) / (sum_t + sum_p + smooth)
    return bce_sum - dice


def _reference(net_output, target, smooth=SMOOTH):
    x = net_output.astype(jnp.float32)
    t = target.astype(jnp.float32)
    bce = jnp.sum(jnp.maximum(x, 0.0) - x * t + jnp.log1p(jnp.exp(-jnp.abs(x))))
    p = jax.nn.sigmoid(x)
    num = jnp.sum(2.0 * p * t) + smooth * x.size
    den = jnp.sum(t) + jnp.sum(p) + smooth
    return bce - num / den


if __name__ == "__main__":
    key = jax.random.PRNGKey(0)
    k1, k2, k3, k4 = jax.random.split(key, 4)

    # BraTS-style NCDHW logits / binary region targets (small demo volume).
    shape = (2, 3, 8, 24, 24)                      # 27648 elements, block-aligned (no pad path)
    logits = jax.random.normal(k1, shape, dtype=jnp.float32)
    tgt = (jax.random.uniform(k2, shape) > 0.5).astype(jnp.float32)

    out1 = jax.block_until_ready(dc_and_bce_loss(logits, tgt))
    ref1 = _reference(logits, tgt)
    assert jnp.allclose(out1, ref1, rtol=1e-5, atol=1e-3), (out1, ref1)

    # Small tiles -> multi-block grid + 2-core parallel axis + sentinel tail padding.
    out2 = jax.block_until_ready(dc_and_bce_loss(logits, tgt, tile_rows=64))
    assert jnp.allclose(out2, ref1, rtol=1e-5, atol=1e-3), (out2, ref1)

    # Native bf16 logits with a ragged element count (not a multiple of 128).
    shape3 = (1, 3, 5, 7, 11)
    logits3 = jax.random.normal(k3, shape3, dtype=jnp.bfloat16)
    tgt3 = (jax.random.uniform(k4, shape3) > 0.5).astype(jnp.bfloat16)
    out3 = jax.block_until_ready(dc_and_bce_loss(logits3, tgt3))
    ref3 = _reference(logits3, tgt3)
    assert jnp.allclose(out3, ref3, rtol=1e-5, atol=1e-3), (out3, ref3)

    print("KERNEL_OK")
</pallas_src>

<mosaic_0001>
module attributes {stable_mosaic.version = 11 : i64} {
  func.func @_loss_kernel(%arg0: i32, %arg1: i32, %arg2: memref<216x128xf32, #tpu.memory_space<vmem>>, %arg3: memref<216x128xf32, #tpu.memory_space<vmem>>, %arg4: memref<1x4x8x128xf32, #tpu.memory_space<vmem>>) attributes {dimension_semantics = [#tpu.dimension_semantics<parallel>, #tpu.dimension_semantics<arbitrary>], iteration_bounds = array<i64: 1, 1>, scalar_prefetch = 0 : i64, scratch_operands = 0 : i64, tpu.core_type = #tpu.core_type<tc>, window_params = [{transform_indices = @transform_0, window_bounds = array<i64: 216, 128>}, {transform_indices = @transform_1, window_bounds = array<i64: 216, 128>}, {transform_indices = @transform_2, window_bounds = array<i64: 1, 4, 8, 128>}]} {
    %c0_i32 = arith.constant 0 : i32
    %0 = arith.cmpi eq, %arg1, %c0_i32 : i32
    %1 = arith.extui %0 : i1 to i32
    %c0_i32_0 = arith.constant 0 : i32
    %2 = arith.cmpi ne, %1, %c0_i32_0 : i32
    scf.if %2 {
      %cst_40 = arith.constant 0.000000e+00 : f32
      %55 = vector.broadcast %cst_40 : f32 to vector<4x8x128xf32>
      %c0_41 = arith.constant 0 : index
      %c0_42 = arith.constant 0 : index
      %c0_43 = arith.constant 0 : index
      %c0_44 = arith.constant 0 : index
      %56 = vector.load %arg4[%c0_41, %c0_42, %c0_43, %c0_44] : memref<1x4x8x128xf32, #tpu.memory_space<vmem>>, vector<1x4x8x128xf32>
      %57 = vector.shape_cast %56 : vector<1x4x8x128xf32> to vector<4x8x128xf32>
      %58 = vector.shape_cast %55 : vector<4x8x128xf32> to vector<1x4x8x128xf32>
      tpu.vector_store %arg4[%c0_41, %c0_42, %c0_43, %c0_44], %58 {strides = array<i32>} : memref<1x4x8x128xf32, #tpu.memory_space<vmem>>, vector<1x4x8x128xf32>,
    } else {
    }
    %c0 = arith.constant 0 : index
    %c0_1 = arith.constant 0 : index
    %3 = vector.load %arg2[%c0, %c0_1] : memref<216x128xf32, #tpu.memory_space<vmem>>, vector<216x128xf32>
    %c0_2 = arith.constant 0 : index
    %c0_3 = arith.constant 0 : index
    %4 = vector.load %arg3[%c0_2, %c0_3] : memref<216x128xf32, #tpu.memory_space<vmem>>, vector<216x128xf32>
    %5 = math.absf %3 : vector<216x128xf32>
    %cst = arith.constant 0.000000e+00 : f32
    %6 = vector.broadcast %cst : f32 to vector<216x128xf32>
    %7 = arith.subf %6, %5 : vector<216x128xf32>
    %8 = math.exp %7 : vector<216x128xf32>
    %cst_4 = arith.constant 0.000000e+00 : f32
    %9 = vector.broadcast %cst_4 : f32 to vector<216x128xf32>
    %10 = arith.maximumf %3, %9 : vector<216x128xf32>
    %11 = arith.mulf %3, %4 : vector<216x128xf32>
    %12 = arith.subf %10, %11 : vector<216x128xf32>
    %13 = math.log1p %8 : vector<216x128xf32>
    %14 = arith.addf %12, %13 : vector<216x128xf32>
    %cst_5 = arith.constant 1.000000e+00 : f32
    %15 = vector.broadcast %cst_5 : f32 to vector<216x128xf32>
    %16 = arith.addf %15, %8 : vector<216x128xf32>
    %17 = tpu.reciprocal %16 {approx = true} : vector<216x128xf32> -> vector<216x128xf32>
    %cst_6 = arith.constant 0.000000e+00 : f32
    %18 = vector.broadcast %cst_6 : f32 to vector<216x128xf32>
    %19 = arith.cmpf oge, %3, %18 : vector<216x128xf32>
    %20 = arith.mulf %8, %17 : vector<216x128xf32>
    %21 = arith.select %19, %17, %20 : vector<216x128xi1>, vector<216x128xf32>
    %c0_7 = arith.constant 0 : index
    %c0_8 = arith.constant 0 : index
    %c0_9 = arith.constant 0 : index
    %c0_10 = arith.constant 0 : index
    %22 = vector.load %arg4[%c0_7, %c0_8, %c0_9, %c0_10] : memref<1x4x8x128xf32, #tpu.memory_space<vmem>>, vector<1x1x8x128xf32>
    %23 = vector.shape_cast %22 : vector<1x1x8x128xf32> to vector<8x128xf32>
    %24 = vector.shape_cast %14 : vector<216x128xf32> to vector<27x8x128xf32>
    %cst_11 = arith.constant dense<0.000000e+00> : vector<8x128xf32>
    %25 = vector.multi_reduction <add>, %24, %cst_11 [0] : vector<27x8x128xf32> to vector<8x128xf32>
    %26 = arith.addf %23, %25 : vector<8x128xf32>
    %c0_12 = arith.constant 0 : index
    %c0_13 = arith.constant 0 : index
    %c0_14 = arith.constant 0 : index
    %c0_15 = arith.constant 0 : index
    %27 = vector.load %arg4[%c0_12, %c0_13, %c0_14, %c0_15] : memref<1x4x8x128xf32, #tpu.memory_space<vmem>>, vector<1x1x8x128xf32>
    %28 = vector.shape_cast %27 : vector<1x1x8x128xf32> to vector<8x128xf32>
    %29 = vector.shape_cast %26 : vector<8x128xf32> to vector<1x1x8x128xf32>
    tpu.vector_store %arg4[%c0_12, %c0_13, %c0_14, %c0_15], %29 {strides = array<i32>} : memref<1x4x8x128xf32, #tpu.memory_space<vmem>>, vector<1x1x8x128xf32>,
    %c0_16 = arith.constant 0 : index
    %c1 = arith.constant 1 : index
    %c0_17 = arith.constant 0 : index
    %c0_18 = arith.constant 0 : index
    %30 = vector.load %arg4[%c0_16, %c1, %c0_17, %c0_18] : memref<1x4x8x128xf32, #tpu.memory_space<vmem>>, vector<1x1x8x128xf32>
    %31 = vector.shape_cast %30 : vector<1x1x8x128xf32> to vector<8x128xf32>
    %32 = arith.mulf %21, %4 : vector<216x128xf32>
    %33 = vector.shape_cast %32 : vector<216x128xf32> to vector<27x8x128xf32>
    %cst_19 = arith.constant dense<0.000000e+00> : vector<8x128xf32>
    %34 = vector.multi_reduction <add>, %33, %cst_19 [0] : vector<27x8x128xf32> to vector<8x128xf32>
    %35 = arith.addf %31, %34 : vector<8x128xf32>
    %c0_20 = arith.constant 0 : index
    %c1_21 = arith.constant 1 : index
    %c0_22 = arith.constant 0 : index
    %c0_23 = arith.constant 0 : index
    %36 = vector.load %arg4[%c0_20, %c1_21, %c0_22, %c0_23] : memref<1x4x8x128xf32, #tpu.memory_space<vmem>>, vector<1x1x8x128xf32>
    %37 = vector.shape_cast %36 : vector<1x1x8x128xf32> to vector<8x128xf32>
    %38 = vector.shape_cast %35 : vector<8x128xf32> to vector<1x1x8x128xf32>
    tpu.vector_store %arg4[%c0_20, %c1_21, %c0_22, %c0_23], %38 {strides = array<i32>} : memref<1x4x8x128xf32, #tpu.memory_space<vmem>>, vector<1x1x8x128xf32>,
    %c0_24 = arith.constant 0 : index
    %c2 = arith.constant 2 : index
    %c0_25 = arith.constant 0 : index
    %c0_26 = arith.constant 0 : index
    %39 = vector.load %arg4[%c0_24, %c2, %c0_25, %c0_26] : memref<1x4x8x128xf32, #tpu.memory_space<vmem>>, vector<1x1x8x128xf32>
    %40 = vector.shape_cast %39 : vector<1x1x8x128xf32> to vector<8x128xf32>
    %41 = vector.shape_cast %21 : vector<216x128xf32> to vector<27x8x128xf32>
    %cst_27 = arith.constant dense<0.000000e+00> : vector<8x128xf32>
    %42 = vector.multi_reduction <add>, %41, %cst_27 [0] : vector<27x8x128xf32> to vector<8x128xf32>
    %43 = arith.addf %40, %42 : vector<8x128xf32>
    %c0_28 = arith.constant 0 : index
    %c2_29 = arith.constant 2 : index
    %c0_30 = arith.constant 0 : index
    %c0_31 = arith.constant 0 : index
    %44 = vector.load %arg4[%c0_28, %c2_29, %c0_30, %c0_31] : memref<1x4x8x128xf32, #tpu.memory_space<vmem>>, vector<1x1x8x128xf32>
    %45 = vector.shape_cast %44 : vector<1x1x8x128xf32> to vector<8x128xf32>
    %46 = vector.shape_cast %43 : vector<8x128xf32> to vector<1x1x8x128xf32>
    tpu.vector_store %arg4[%c0_28, %c2_29, %c0_30, %c0_31], %46 {strides = array<i32>} : memref<1x4x8x128xf32, #tpu.memory_space<vmem>>, vector<1x1x8x128xf32>,
    %c0_32 = arith.constant 0 : index
    %c3 = arith.constant 3 : index
    %c0_33 = arith.constant 0 : index
    %c0_34 = arith.constant 0 : index
    %47 = vector.load %arg4[%c0_32, %c3, %c0_33, %c0_34] : memref<1x4x8x128xf32, #tpu.memory_space<vmem>>, vector<1x1x8x128xf32>
    %48 = vector.shape_cast %47 : vector<1x1x8x128xf32> to vector<8x128xf32>
    %49 = vector.shape_cast %4 : vector<216x128xf32> to vector<27x8x128xf32>
    %cst_35 = arith.constant dense<0.000000e+00> : vector<8x128xf32>
    %50 = vector.multi_reduction <add>, %49, %cst_35 [0] : vector<27x8x128xf32> to vector<8x128xf32>
    %51 = arith.addf %48, %50 : vector<8x128xf32>
    %c0_36 = arith.constant 0 : index
    %c3_37 = arith.constant 3 : index
    %c0_38 = arith.constant 0 : index
    %c0_39 = arith.constant 0 : index
    %52 = vector.load %arg4[%c0_36, %c3_37, %c0_38, %c0_39] : memref<1x4x8x128xf32, #tpu.memory_space<vmem>>, vector<1x1x8x128xf32>
    %53 = vector.shape_cast %52 : vector<1x1x8x128xf32> to vector<8x128xf32>
    %54 = vector.shape_cast %51 : vector<8x128xf32> to vector<1x1x8x128xf32>
    tpu.vector_store %arg4[%c0_36, %c3_37, %c0_38, %c0_39], %54 {strides = array<i32>} : memref<1x4x8x128xf32, #tpu.memory_space<vmem>>, vector<1x1x8x128xf32>,
    return
  }
  func.func @transform_0(%arg0: i32, %arg1: i32) -> (i32, i32) {
    %c1_i32 = arith.constant 1 : i32
    %0 = arith.muli %arg0, %c1_i32 : i32
    %1 = arith.addi %0, %arg1 : i32
    %c0_i32 = arith.constant 0 : i32
    %c0_i32_0 = arith.constant 0 : i32
    return %1, %c0_i32 : i32, i32
  }
  func.func @transform_1(%arg0: i32, %arg1: i32) -> (i32, i32) {
    %c1_i32 = arith.constant 1 : i32
    %0 = arith.muli %arg0, %c1_i32 : i32
    %1 = arith.addi %0, %arg1 : i32
    %c0_i32 = arith.constant 0 : i32
    %c0_i32_0 = arith.constant 0 : i32
    return %1, %c0_i32 : i32, i32
  }
  func.func @transform_2(%arg0: i32, %arg1: i32) -> (i32, i32, i32, i32) {
    %c0_i32 = arith.constant 0 : i32
    %c0_i32_0 = arith.constant 0 : i32
    %c0_i32_1 = arith.constant 0 : i32
    %c0_i32_2 = arith.constant 0 : i32
    return %arg0, %c0_i32, %c0_i32_0, %c0_i32_1 : i32, i32, i32, i32
  }
}

</mosaic_0001>

<llo_original>
// kernel: tpu_custom_call.1
$region0: #{tpu_custom_call.1}
  #allocation0 [shape = 'u32[]', space=smem, size = 0x4, offset = 0x4, fixed_abs, tag = 'smem constant byte address 0x4 - core index']
  #allocation1 [shape = 'u32[72,128]{1,0:T(1,128)}', space=vmem, size = 0x9000, scoped, tag = 'internal scratch']
  %s0 = inlined_call_operand.hbm [shape: f32[216,128], index: 0, kind: input, shape index: {}]
  %s1 = inlined_call_operand.hbm [shape: f32[216,128], index: 1, kind: input, shape index: {}]
  %s2 = inlined_call_operand.hbm [shape: f32[1,4,8,128], index: 2, kind: output, shape index: {}]
  %s3 = sld [smem:[#allocation0]]
  $region30: #{tpu_custom_call.1} parent=0
    _
  %s5 = ssub.s32 1, %s3
  %s6 = scalar_select 0, %s5, %s3
  $region1: #{tpu_custom_call.1} parent=0
    #allocation2 [shape = 'u8[110592]{0}', space=vmem, size = 0x1b000, scoped, tag = 'input window, operand 0, single buffered']
    #allocation3 [shape = 's32[1]{0}', space=sflag, size = 0x4, scoped, tag = 'scoped memory for tpu_custom_call.1']
    #allocation4 [shape = 's32[1]{0}', space=sflag, size = 0x4, scoped, tag = 'scoped memory for tpu_custom_call.1']
    #allocation5 [shape = 'u8[110592]{0}', space=vmem, size = 0x1b000, scoped, tag = 'input window, operand 1, single buffered']
    #allocation6 [shape = 's32[1]{0}', space=sflag, size = 0x4, scoped, tag = 'scoped memory for tpu_custom_call.1']
    #allocation7 [shape = 'u8[16384]{0}', space=vmem, size = 0x4000, scoped, tag = 'output window, operand 0, single buffered']
    %7 = vsyncpa [#allocation3], 0
    %8 = vsyncpa [#allocation6], 0
    %9 = vsyncpa [#allocation4], 0
    // Predicated region
    $region2: #{tpu_custom_call.1} parent=1 // pred_check
      _
    $region3: #{tpu_custom_call.1} parent=1 // pred_check_branch
      %11 = sbr.rel (0) target = $region5
    $region4: #{tpu_custom_call.1} parent=1 // pred_region
      %s12 = sadd.s32 0, 0
      %s13 = smul.u32 27, %s12
      %15 = vsyncadd [#allocation3], 0
      %s16 = smul.addr %s13, 8
      %s17 = scalar_lea.hbm %s0, %s16
      %s18 = sshll.u32 %s17, 4
      %s19 = int_to_ptr.hbm [resolvable:$true] %s18
      %s20 = sshll.u32 [#allocation2], 4
      %s21 = int_to_ptr.vmem [resolvable:$true] %s20
      %26 = dma.hbm_to_vmem [thread:$0]  %s19, 3456, %s21, [#allocation3], 128, 128, 8
    $region5: #{tpu_custom_call.1} parent=1 // pred_fallthru
      _
    // Predicated region
    $region6: #{tpu_custom_call.1} parent=1 // pred_check
      _
    $region7: #{tpu_custom_call.1} parent=1 // pred_check_branch
      %28 = sbr.rel (0) target = $region9
    $region8: #{tpu_custom_call.1} parent=1 // pred_region
      %s29 = sadd.s32 0, 0
      %s30 = smul.u32 27, %s29
      %32 = vsyncadd [#allocation6], 0
      %s33 = smul.addr %s30, 8
      %s34 = scalar_lea.hbm %s1, %s33
      %s35 = sshll.u32 %s34, 4
      %s36 = int_to_ptr.hbm [resolvable:$true] %s35
      %s37 = sshll.u32 [#allocation5], 4
      %s38 = int_to_ptr.vmem [resolvable:$true] %s37
      %43 = dma.hbm_to_vmem [thread:$0]  %s36, 3456, %s38, [#allocation6], 128, 128, 8
    $region9: #{tpu_custom_call.1} parent=1 // pred_fallthru
      _
    // Predicated region
    $region10: #{tpu_custom_call.1} parent=1 // pred_check
      _
    $region11: #{tpu_custom_call.1} parent=1 // pred_check_branch
      %45 = sbr.rel (0) target = $region13
    $region12: #{tpu_custom_call.1} parent=1 // pred_region
      %47 = dma.done [#allocation3], 3456
    $region13: #{tpu_custom_call.1} parent=1 // pred_fallthru
      _
    // Predicated region
    $region14: #{tpu_custom_call.1} parent=1 // pred_check
      _
    $region15: #{tpu_custom_call.1} parent=1 // pred_check_branch
      %49 = sbr.rel (0) target = $region17
    $region16: #{tpu_custom_call.1} parent=1 // pred_region
      %51 = dma.done [#allocation6], 3456
    $region17: #{tpu_custom_call.1} parent=1 // pred_fallthru
      _
    %s52 = sadd.s32 0, 0
    %s53 = smul.u32 27, %s52
    %s54 = sadd.s32 0, 0
    %s55 = smul.u32 27, %s54
    %p56 = scmp.eq.s32.totalorder 0, 0
    // Predicated region
    $region18: #{tpu_custom_call.1} parent=1 // pred_check
      %p57 = pneg %p56
    $region19: #{tpu_custom_call.1} parent=1 // pred_check_branch
      %59 = sbr.rel (%p57) target = $region21
    $region20: #{tpu_custom_call.1} parent=1 // pred_region
      %60 = vst [vmem:[#allocation7] sm:$0xff] 0.0
      %61 = vst [vmem:[#allocation7 + $0x8] sm:$0xff] 0.0
      %62 = vst [vmem:[#allocation7 + $0x10] sm:$0xff] 0.0
      %63 = vst [vmem:[#allocation7 + $0x18] sm:$0xff] 0.0
    $region21: #{tpu_custom_call.1} parent=1 // pred_fallthru
      _
    %v64 = vld [vmem:[#allocation2] sm:$0xff]
    %v65 = vld [vmem:[#allocation2 + $0x8] sm:$0xff]
    %v66 = vld [vmem:[#allocation2 + $0x10] sm:$0xff]
    %v67 = vld [vmem:[#allocation2 + $0x18] sm:$0xff]
    %v68 = vld [vmem:[#allocation2 + $0x20] sm:$0xff]
    %v69 = vld [vmem:[#allocation2 + $0x28] sm:$0xff]
    %v70 = vld [vmem:[#allocation2 + $0x30] sm:$0xff]
    %v71 = vld [vmem:[#allocation2 + $0x38] sm:$0xff]
    %v72 = vld [vmem:[#allocation2 + $0x40] sm:$0xff]
    %v73 = vld [vmem:[#allocation2 + $0x48] sm:$0xff]
    %v74 = vld [vmem:[#allocation2 + $0x50] sm:$0xff]
    %v75 = vld [vmem:[#allocation2 + $0x58] sm:$0xff]
    %v76 = vld [vmem:[#allocation2 + $0x60] sm:$0xff]
    %v77 = vld [vmem:[#allocation2 + $0x68] sm:$0xff]
    %v78 = vld [vmem:[#allocation2 + $0x70] sm:$0xff]
    %v79 = vld [vmem:[#allocation2 + $0x78] sm:$0xff]
    %v80 = vld [vmem:[#allocation2 + $0x80] sm:$0xff]
    %v81 = vld [vmem:[#allocation2 + $0x88] sm:$0xff]
    %v82 = vld [vmem:[#allocation2 + $0x90] sm:$0xff]
    %v83 = vld [vmem:[#allocation2 + $0x98] sm:$0xff]
    %v84 = vld [vmem:[#allocation2 + $0xa0] sm:$0xff]
    %v85 = vld [vmem:[#allocation2 + $0xa8] sm:$0xff]
    %v86 = vld [vmem:[#allocation2 + $0xb0] sm:$0xff]
    %v87 = vld [vmem:[#allocation2 + $0xb8] sm:$0xff]
    %v88 = vld [vmem:[#allocation2 + $0xc0] sm:$0xff]
    %v89 = vld [vmem:[#allocation2 + $0xc8] sm:$0xff]
    %v90 = vld [vmem:[#allocation2 + $0xd0] sm:$0xff]
    %v91 = vld [vmem:[#allocation5] sm:$0xff]
    %v92 = vld [vmem:[#allocation5 + $0x8] sm:$0xff]
    %v93 = vld [vmem:[#allocation5 + $0x10] sm:$0xff]
    %v94 = vld [vmem:[#allocation5 + $0x18] sm:$0xff]
    %v95 = vld [vmem:[#allocation5 + $0x20] sm:$0xff]
    %v96 = vld [vmem:[#allocation5 + $0x28] sm:$0xff]
    %v97 = vld [vmem:[#allocation5 + $0x30] sm:$0xff]
    %v98 = vld [vmem:[#allocation5 + $0x38] sm:$0xff]
    %v99 = vld [vmem:[#allocation5 + $0x40] sm:$0xff]
    %v100 = vld [vmem:[#allocation5 + $0x48] sm:$0xff]
    %v101 = vld [vmem:[#allocation5 + $0x50] sm:$0xff]
    %v102 = vld [vmem:[#allocation5 + $0x58] sm:$0xff]
    %v103 = vld [vmem:[#allocation5 + $0x60] sm:$0xff]
    %v104 = vld [vmem:[#allocation5 + $0x68] sm:$0xff]
    %v105 = vld [vmem:[#allocation5 + $0x70] sm:$0xff]
    %v106 = vld [vmem:[#allocation5 + $0x78] sm:$0xff]
    %v107 = vld [vmem:[#allocation5 + $0x80] sm:$0xff]
    %v108 = vld [vmem:[#allocation5 + $0x88] sm:$0xff]
    %v109 = vld [vmem:[#allocation5 + $0x90] sm:$0xff]
    %v110 = vld [vmem:[#allocation5 + $0x98] sm:$0xff]
    %v111 = vld [vmem:[#allocation5 + $0xa0] sm:$0xff]
    %v112 = vld [vmem:[#allocation5 + $0xa8] sm:$0xff]
    %v113 = vld [vmem:[#allocation5 + $0xb0] sm:$0xff]
    %v114 = vld [vmem:[#allocation5 + $0xb8] sm:$0xff]
    %v115 = vld [vmem:[#allocation5 + $0xc0] sm:$0xff]
    %v116 = vld [vmem:[#allocation5 + $0xc8] sm:$0xff]
    %v117 = vld [vmem:[#allocation5 + $0xd0] sm:$0xff]
    %v118 = vand.u32 2147483647, %v64
    %v119 = vand.u32 2147483647, %v65
    %v120 = vand.u32 2147483647, %v66
    %v121 = vand.u32 2147483647, %v67
    %v122 = vand.u32 2147483647, %v68
    %v123 = vand.u32 2147483647, %v69
    %v124 = vand.u32 2147483647, %v70
    %v125 = vand.u32 2147483647, %v71
    %v126 = vand.u32 2147483647, %v72
    %v127 = vand.u32 2147483647, %v73
    %v128 = vand.u32 2147483647, %v74
    %v129 = vand.u32 2147483647, %v75
    %v130 = vand.u32 2147483647, %v76
    %v131 = vand.u32 2147483647, %v77
    %v132 = vand.u32 2147483647, %v78
    %v133 = vand.u32 2147483647, %v79
    %v134 = vand.u32 2147483647, %v80
    %v135 = vand.u32 2147483647, %v81
    %v136 = vand.u32 2147483647, %v82
    %v137 = vand.u32 2147483647, %v83
    %v138 = vand.u32 2147483647, %v84
    %v139 = vand.u32 2147483647, %v85
    %v140 = vand.u32 2147483647, %v86
    %v141 = vand.u32 2147483647, %v87
    %v142 = vand.u32 2147483647, %v88
    %v143 = vand.u32 2147483647, %v89
    %v144 = vand.u32 2147483647, %v90
    %v145 = vsub.f32 0.0, %v118
    %v146 = vsub.f32 0.0, %v119
    %v147 = vsub.f32 0.0, %v120
    %v148 = vsub.f32 0.0, %v121
    %v149 = vsub.f32 0.0, %v122
    %v150 = vsub.f32 0.0, %v123
    %v151 = vsub.f32 0.0, %v124
    %v152 = vsub.f32 0.0, %v125
    %v153 = vsub.f32 0.0, %v126
    %v154 = vsub.f32 0.0, %v127
    %v155 = vsub.f32 0.0, %v128
    %v156 = vsub.f32 0.0, %v129
    %v157 = vsub.f32 0.0, %v130
    %v158 = vsub.f32 0.0, %v131
    %v159 = vsub.f32 0.0, %v132
    %v160 = vsub.f32 0.0, %v133
    %v161 = vsub.f32 0.0, %v134
    %v162 = vsub.f32 0.0, %v135
    %v163 = vsub.f32 0.0, %v136
    %v164 = vsub.f32 0.0, %v137
    %v165 = vsub.f32 0.0, %v138
    %v166 = vsub.f32 0.0, %v139
    %v167 = vsub.f32 0.0, %v140
    %v168 = vsub.f32 0.0, %v141
    %v169 = vsub.f32 0.0, %v142
    %v170 = vsub.f32 0.0, %v143
    %v171 = vsub.f32 0.0, %v144
    %v172 = vmul.f32 %v145, 1.442695
    %v173 = vpow.pop %v172
    %v174 = vmul.f32 %v146, 1.442695
    %v175 = vpow.pop %v174
    %v176 = vmul.f32 %v147, 1.442695
    %v177 = vpow.pop %v176
    %v178 = vmul.f32 %v148, 1.442695
    %v179 = vpow.pop %v178
    %v180 = vmul.f32 %v149, 1.442695
    %v181 = vpow.pop %v180
    %v182 = vmul.f32 %v150, 1.442695
    %v183 = vpow.pop %v182
    %v184 = vmul.f32 %v151, 1.442695
    %v185 = vpow.pop %v184
    %v186 = vmul.f32 %v152, 1.442695
    %v187 = vpow.pop %v186
    %v188 = vmul.f32 %v153, 1.442695
    %v189 = vpow.pop %v188
    %v190 = vmul.f32 %v154, 1.442695
    %v191 = vpow.pop %v190
    %v192 = vmul.f32 %v155, 1.442695
    %v193 = vpow.pop %v192
    %v194 = vmul.f32 %v156, 1.442695
    %v195 = vpow.pop %v194
    %v196 = vmul.f32 %v157, 1.442695
    %v197 = vpow.pop %v196
    %v198 = vmul.f32 %v158, 1.442695
    %v199 = vpow.pop %v198
    %v200 = vmul.f32 %v159, 1.442695
    %v201 = vpow.pop %v200
    %v202 = vmul.f32 %v160, 1.442695
    %v203 = vpow.pop %v202
    %v204 = vmul.f32 %v161, 1.442695
    %v205 = vpow.pop %v204
    %v206 = vmul.f32 %v162, 1.442695
    %v207 = vpow.pop %v206
    %v208 = vmul.f32 %v163, 1.442695
    %v209 = vpow.pop %v208
    %v210 = vmul.f32 %v164, 1.442695
    %v211 = vpow.pop %v210
    %v212 = vmul.f32 %v165, 1.442695
    %v213 = vpow.pop %v212
    %v214 = vmul.f32 %v166, 1.442695
    %v215 = vpow.pop %v214
    %v216 = vmul.f32 %v167, 1.442695
    %v217 = vpow.pop %v216
    %v218 = vmul.f32 %v168, 1.442695
    %v219 = vpow.pop %v218
    %v220 = vmul.f32 %v169, 1.442695
    %v221 = vpow.pop %v220
    %v222 = vmul.f32 %v170, 1.442695
    %v223 = vpow.pop %v222
    %v224 = vmul.f32 %v171, 1.442695
    %v225 = vpow.pop %v224
    %v226 = vmax.f32 %v64, 0.0
    %v227 = vmax.f32 %v65, 0.0
    %v228 = vmax.f32 %v66, 0.0
    %v229 = vmax.f32 %v67, 0.0
    %v230 = vmax.f32 %v68, 0.0
    %v231 = vmax.f32 %v69, 0.0
    %v232 = vmax.f32 %v70, 0.0
    %v233 = vmax.f32 %v71, 0.0
    %v234 = vmax.f32 %v72, 0.0
    %v235 = vmax.f32 %v73, 0.0
    %v236 = vmax.f32 %v74, 0.0
    %v237 = vmax.f32 %v75, 0.0
    %v238 = vmax.f32 %v76, 0.0
    %v239 = vmax.f32 %v77, 0.0
    %v240 = vmax.f32 %v78, 0.0
    %v241 = vmax.f32 %v79, 0.0
    %v242 = vmax.f32 %v80, 0.0
    %v243 = vmax.f32 %v81, 0.0
    %v244 = vmax.f32 %v82, 0.0
    %v245 = vmax.f32 %v83, 0.0
    %v246 = vmax.f32 %v84, 0.0
    %v247 = vmax.f32 %v85, 0.0
    %v248 = vmax.f32 %v86, 0.0
    %v249 = vmax.f32 %v87, 0.0
    %v250 = vmax.f32 %v88, 0.0
    %v251 = vmax.f32 %v89, 0.0
    %v252 = vmax.f32 %v90, 0.0
    %v253 = vmul.f32 %v64, %v91
    %v254 = vmul.f32 %v65, %v92
    %v255 = vmul.f32 %v66, %v93
    %v256 = vmul.f32 %v67, %v94
    %v257 = vmul.f32 %v68, %v95
    %v258 = vmul.f32 %v69, %v96
    %v259 = vmul.f32 %v70, %v97
    %v260 = vmul.f32 %v71, %v98
    %v261 = vmul.f32 %v72, %v99
    %v262 = vmul.f32 %v73, %v100
    %v263 = vmul.f32 %v74, %v101
    %v264 = vmul.f32 %v75, %v102
    %v265 = vmul.f32 %v76, %v103
    %v266 = vmul.f32 %v77, %v104
    %v267 = vmul.f32 %v78, %v105
    %v268 = vmul.f32 %v79, %v106
    %v269 = vmul.f32 %v80, %v107
    %v270 = vmul.f32 %v81, %v108
    %v271 = vmul.f32 %v82, %v109
    %v272 = vmul.f32 %v83, %v110
    %v273 = vmul.f32 %v84, %v111
    %v274 = vmul.f32 %v85, %v112
    %v275 = vmul.f32 %v86, %v113
    %v276 = vmul.f32 %v87, %v114
    %v277 = vmul.f32 %v88, %v115
    %v278 = vmul.f32 %v89, %v116
    %v279 = vmul.f32 %v90, %v117
    %v280 = vsub.f32 %v226, %v253
    %v281 = vsub.f32 %v227, %v254
    %v282 = vsub.f32 %v228, %v255
    %v283 = vsub.f32 %v229, %v256
    %v284 = vsub.f32 %v230, %v257
    %v285 = vsub.f32 %v231, %v258
    %v286 = vsub.f32 %v232, %v259
    %v287 = vsub.f32 %v233, %v260
    %v288 = vsub.f32 %v234, %v261
    %v289 = vsub.f32 %v235, %v262
    %v290 = vsub.f32 %v236, %v263
    %v291 = vsub.f32 %v237, %v264
    %v292 = vsub.f32 %v238, %v265
    %v293 = vsub.f32 %v239, %v266
    %v294 = vsub.f32 %v240, %v267
    %v295 = vsub.f32 %v241, %v268
    %v296 = vsub.f32 %v242, %v269
    %v297 = vsub.f32 %v243, %v270
    %v298 = vsub.f32 %v244, %v271
    %v299 = vsub.f32 %v245, %v272
    %v300 = vsub.f32 %v246, %v273
    %v301 = vsub.f32 %v247, %v274
    %v302 = vsub.f32 %v248, %v275
    %v303 = vsub.f32 %v249, %v276
    %v304 = vsub.f32 %v250, %v277
    %v305 = vsub.f32 %v251, %v278
    %v306 = vsub.f32 %v252, %v279
    %v307 = vadd.f32 %v173, 1.0
    %v308 = vlog2.pop %v307
    %v309 = vmul.f32 %v308, 0.6931472
    %v310 = vmul.f32 -0.5, %v173
    %v311 = vadd.f32 %v310, 1.0
    %v312 = vmul.f32 %v311, %v173
    %v313 = vand.u32 2147483647, %v173
    %vm314 = vcmp.lt.f32.partialorder %v313, 0.0004427343
    %v315 = vsel %vm314, %v312, %v309
    %v316 = vadd.f32 %v175, 1.0
    %v317 = vlog2.pop %v316
    %v318 = vmul.f32 %v317, 0.6931472
    %v319 = vmul.f32 -0.5, %v175
    %v320 = vadd.f32 %v319, 1.0
    %v321 = vmul.f32 %v320, %v175
    %v322 = vand.u32 2147483647, %v175
    %vm323 = vcmp.lt.f32.partialorder %v322, 0.0004427343
    %v324 = vsel %vm323, %v321, %v318
    %v325 = vadd.f32 %v177, 1.0
    %v326 = vlog2.pop %v325
    %v327 = vmul.f32 %v326, 0.6931472
    %v328 = vmul.f32 -0.5, %v177
    %v329 = vadd.f32 %v328, 1.0
    %v330 = vmul.f32 %v329, %v177
    %v331 = vand.u32 2147483647, %v177
    %vm332 = vcmp.lt.f32.partialorder %v331, 0.0004427343
    %v333 = vsel %vm332, %v330, %v327
    %v334 = vadd.f32 %v179, 1.0
    %v335 = vlog2.pop %v334
    %v336 = vmul.f32 %v335, 0.6931472
    %v337 = vmul.f32 -0.5, %v179
    %v338 = vadd.f32 %v337, 1.0
    %v339 = vmul.f32 %v338, %v179
    %v340 = vand.u32 2147483647, %v179
    %vm341 = vcmp.lt.f32.partialorder %v340, 0.0004427343
    %v342 = vsel %vm341, %v339, %v336
    %v343 = vadd.f32 %v181, 1.0
    %v344 = vlog2.pop %v343
    %v345 = vmul.f32 %v344, 0.6931472
    %v346 = vmul.f32 -0.5, %v181
    %v347 = vadd.f32 %v346, 1.0
    %v348 = vmul.f32 %v347, %v181
    %v349 = vand.u32 2147483647, %v181
    %vm350 = vcmp.lt.f32.partialorder %v349, 0.0004427343
    %v351 = vsel %vm350, %v348, %v345
    %v352 = vadd.f32 %v183, 1.0
    %v353 = vlog2.pop %v352
    %v354 = vmul.f32 %v353, 0.6931472
    %v355 = vmul.f32 -0.5, %v183
    %v356 = vadd.f32 %v355, 1.0
    %v357 = vmul.f32 %v356, %v183
    %v358 = vand.u32 2147483647, %v183
    %vm359 = vcmp.lt.f32.partialorder %v358, 0.0004427343
    %v360 = vsel %vm359, %v357, %v354
    %v361 = vadd.f32 %v185, 1.0
    %v362 = vlog2.pop %v361
    %v363 = vmul.f32 %v362, 0.6931472
    %v364 = vmul.f32 -0.5, %v185
    %v365 = vadd.f32 %v364, 1.0
    %v366 = vmul.f32 %v365, %v185
    %v367 = vand.u32 2147483647, %v185
    %vm368 = vcmp.lt.f32.partialorder %v367, 0.0004427343
    %v369 = vsel %vm368, %v366, %v363
    %v370 = vadd.f32 %v187, 1.0
    %v371 = vlog2.pop %v370
    %v372 = vmul.f32 %v371, 0.6931472
    %v373 = vmul.f32 -0.5, %v187
    %v374 = vadd.f32 %v373, 1.0
    %v375 = vmul.f32 %v374, %v187
    %v376 = vand.u32 2147483647, %v187
    %vm377 = vcmp.lt.f32.partialorder %v376, 0.0004427343
    %v378 = vsel %vm377, %v375, %v372
    %v379 = vadd.f32 %v189, 1.0
    %v380 = vlog2.pop %v379
    %v381 = vmul.f32 %v380, 0.6931472
    %v382 = vmul.f32 -0.5, %v189
    %v383 = vadd.f32 %v382, 1.0
    %v384 = vmul.f32 %v383, %v189
    %v385 = vand.u32 2147483647, %v189
    %vm386 = vcmp.lt.f32.partialorder %v385, 0.0004427343
    %v387 = vsel %vm386, %v384, %v381
    %v388 = vadd.f32 %v191, 1.0
    %v389 = vlog2.pop %v388
    %v390 = vmul.f32 %v389, 0.6931472
    %v391 = vmul.f32 -0.5, %v191
    %v392 = vadd.f32 %v391, 1.0
    %v393 = vmul.f32 %v392, %v191
    %v394 = vand.u32 2147483647, %v191
    %vm395 = vcmp.lt.f32.partialorder %v394, 0.0004427343
    %v396 = vsel %vm395, %v393, %v390
    %v397 = vadd.f32 %v193, 1.0
    %v398 = vlog2.pop %v397
    %v399 = vmul.f32 %v398, 0.6931472
    %v400 = vmul.f32 -0.5, %v193
    %v401 = vadd.f32 %v400, 1.0
    %v402 = vmul.f32 %v401, %v193
    %v403 = vand.u32 2147483647, %v193
    %vm404 = vcmp.lt.f32.partialorder %v403, 0.0004427343
    %v405 = vsel %vm404, %v402, %v399
    %v406 = vadd.f32 %v195, 1.0
    %v407 = vlog2.pop %v406
    %v408 = vmul.f32 %v407, 0.6931472
    %v409 = vmul.f32 -0.5, %v195
    %v410 = vadd.f32 %v409, 1.0
    %v411 = vmul.f32 %v410, %v195
    %v412 = vand.u32 2147483647, %v195
    %vm413 = vcmp.lt.f32.partialorder %v412, 0.0004427343
    %v414 = vsel %vm413, %v411, %v408
    %v415 = vadd.f32 %v197, 1.0
    %v416 = vlog2.pop %v415
    %v417 = vmul.f32 %v416, 0.6931472
    %v418 = vmul.f32 -0.5, %v197
    %v419 = vadd.f32 %v418, 1.0
    %v420 = vmul.f32 %v419, %v197
    %v421 = vand.u32 2147483647, %v197
    %vm422 = vcmp.lt.f32.partialorder %v421, 0.0004427343
    %v423 = vsel %vm422, %v420, %v417
    %v424 = vadd.f32 %v199, 1.0
    %v425 = vlog2.pop %v424
    %v426 = vmul.f32 %v425, 0.6931472
    %v427 = vmul.f32 -0.5, %v199
    %v428 = vadd.f32 %v427, 1.0
    %v429 = vmul.f32 %v428, %v199
    %v430 = vand.u32 2147483647, %v199
    %vm431 = vcmp.lt.f32.partialorder %v430, 0.0004427343
    %v432 = vsel %vm431, %v429, %v426
    %v433 = vadd.f32 %v201, 1.0
    %v434 = vlog2.pop %v433
    %v435 = vmul.f32 %v434, 0.6931472
    %v436 = vmul.f32 -0.5, %v201
    %v437 = vadd.f32 %v436, 1.0
    %v438 = vmul.f32 %v437, %v201
    %v439 = vand.u32 2147483647, %v201
    %vm440 = vcmp.lt.f32.partialorder %v439, 0.0004427343
    %v441 = vsel %vm440, %v438, %v435
    %v442 = vadd.f32 %v203, 1.0
    %v443 = vlog2.pop %v442
    %v444 = vmul.f32 %v443, 0.6931472
    %v445 = vmul.f32 -0.5, %v203
    %v446 = vadd.f32 %v445, 1.0
    %v447 = vmul.f32 %v446, %v203
    %v448 = vand.u32 2147483647, %v203
    %vm449 = vcmp.lt.f32.partialorder %v448, 0.0004427343
    %v450 = vsel %vm449, %v447, %v444
    %v451 = vadd.f32 %v205, 1.0
    %v452 = vlog2.pop %v451
    %v453 = vmul.f32 %v452, 0.6931472
    %v454 = vmul.f32 -0.5, %v205
    %v455 = vadd.f32 %v454, 1.0
    %v456 = vmul.f32 %v455, %v205
    %v457 = vand.u32 2147483647, %v205
    %vm458 = vcmp.lt.f32.partialorder %v457, 0.0004427343
    %v459 = vsel %vm458, %v456, %v453
    %v460 = vadd.f32 %v207, 1.0
    %v461 = vlog2.pop %v460
    %v462 = vmul.f32 %v461, 0.6931472
    %v463 = vmul.f32 -0.5, %v207
    %v464 = vadd.f32 %v463, 1.0
    %v465 = vmul.f32 %v464, %v207
    %v466 = vand.u32 2147483647, %v207
    %vm467 = vcmp.lt.f32.partialorder %v466, 0.0004427343
    %v468 = vsel %vm467, %v465, %v462
    %v469 = vadd.f32 %v209, 1.0
    %v470 = vlog2.pop %v469
    %v471 = vmul.f32 %v470, 0.6931472
    %v472 = vmul.f32 -0.5, %v209
    %v473 = vadd.f32 %v472, 1.0
    %v474 = vmul.f32 %v473, %v209
    %v475 = vand.u32 2147483647, %v209
    %vm476 = vcmp.lt.f32.partialorder %v475, 0.0004427343
    %v477 = vsel %vm476, %v474, %v471
    %v478 = vadd.f32 %v211, 1.0
    %v479 = vlog2.pop %v478
    %v480 = vmul.f32 %v479, 0.6931472
    %v481 = vmul.f32 -0.5, %v211
    %v482 = vadd.f32 %v481, 1.0
    %v483 = vmul.f32 %v482, %v211
    %v484 = vand.u32 2147483647, %v211
    %vm485 = vcmp.lt.f32.partialorder %v484, 0.0004427343
    %v486 = vsel %vm485, %v483, %v480
    %v487 = vadd.f32 %v213, 1.0
    %v488 = vlog2.pop %v487
    %v489 = vmul.f32 %v488, 0.6931472
    %v490 = vmul.f32 -0.5, %v213
    %v491 = vadd.f32 %v490, 1.0
    %v492 = vmul.f32 %v491, %v213
    %v493 = vand.u32 2147483647, %v213
    %vm494 = vcmp.lt.f32.partialorder %v493, 0.0004427343
    %v495 = vsel %vm494, %v492, %v489
    %v496 = vadd.f32 %v215, 1.0
    %v497 = vlog2.pop %v496
    %v498 = vmul.f32 %v497, 0.6931472
    %v499 = vmul.f32 -0.5, %v215
    %v500 = vadd.f32 %v499, 1.0
    %v501 = vmul.f32 %v500, %v215
    %v502 = vand.u32 2147483647, %v215
    %vm503 = vcmp.lt.f32.partialorder %v502, 0.0004427343
    %v504 = vsel %vm503, %v501, %v498
    %v505 = vadd.f32 %v217, 1.0
    %v506 = vlog2.pop %v505
    %v507 = vmul.f32 %v506, 0.6931472
    %v508 = vmul.f32 -0.5, %v217
    %v509 = vadd.f32 %v508, 1.0
    %v510 = vmul.f32 %v509, %v217
    %v511 = vand.u32 2147483647, %v217
    %vm512 = vcmp.lt.f32.partialorder %v511, 0.0004427343
    %v513 = vsel %vm512, %v510, %v507
    %v514 = vadd.f32 %v219, 1.0
    %v515 = vlog2.pop %v514
    %v516 = vmul.f32 %v515, 0.6931472
    %v517 = vmul.f32 -0.5, %v219
    %v518 = vadd.f32 %v517, 1.0
    %v519 = vmul.f32 %v518, %v219
    %v520 = vand.u32 2147483647, %v219
    %vm521 = vcmp.lt.f32.partialorder %v520, 0.0004427343
    %v522 = vsel %vm521, %v519, %v516
    %v523 = vadd.f32 %v221, 1.0
    %v524 = vlog2.pop %v523
    %v525 = vmul.f32 %v524, 0.6931472
    %v526 = vmul.f32 -0.5, %v221
    %v527 = vadd.f32 %v526, 1.0
    %v528 = vmul.f32 %v527, %v221
    %v529 = vand.u32 2147483647, %v221
    %vm530 = vcmp.lt.f32.partialorder %v529, 0.0004427343
    %v531 = vsel %vm530, %v528, %v525
    %v532 = vadd.f32 %v223, 1.0
    %v533 = vlog2.pop %v532
    %v534 = vmul.f32 %v533, 0.6931472
    %v535 = vmul.f32 -0.5, %v223
    %v536 = vadd.f32 %v535, 1.0
    %v537 = vmul.f32 %v536, %v223
    %v538 = vand.u32 2147483647, %v223
    %vm539 = vcmp.lt.f32.partialorder %v538, 0.0004427343
    %v540 = vsel %vm539, %v537, %v534
    %v541 = vadd.f32 %v225, 1.0
    %v542 = vlog2.pop %v541
    %v543 = vmul.f32 %v542, 0.6931472
    %v544 = vmul.f32 -0.5, %v225
    %v545 = vadd.f32 %v544, 1.0
    %v546 = vmul.f32 %v545, %v225
    %v547 = vand.u32 2147483647, %v225
    %vm548 = vcmp.lt.f32.partialorder %v547, 0.0004427343
    %v549 = vsel %vm548, %v546, %v543
    %v550 = vadd.f32 %v280, %v315
    %v551 = vadd.f32 %v281, %v324
    %v552 = vadd.f32 %v282, %v333
    %v553 = vadd.f32 %v283, %v342
    %v554 = vadd.f32 %v284, %v351
    %v555 = vadd.f32 %v285, %v360
    %v556 = vadd.f32 %v286, %v369
    %v557 = vadd.f32 %v287, %v378
    %v558 = vadd.f32 %v288, %v387
    %v559 = vadd.f32 %v289, %v396
    %v560 = vadd.f32 %v290, %v405
    %v561 = vadd.f32 %v291, %v414
    %v562 = vadd.f32 %v292, %v423
    %v563 = vadd.f32 %v293, %v432
    %v564 = vadd.f32 %v294, %v441
    %v565 = vadd.f32 %v295, %v450
    %v566 = vadd.f32 %v296, %v459
    %v567 = vadd.f32 %v297, %v468
    %v568 = vadd.f32 %v298, %v477
    %v569 = vadd.f32 %v299, %v486
    %v570 = vadd.f32 %v300, %v495
    %v571 = vadd.f32 %v301, %v504
    %v572 = vadd.f32 %v302, %v513
    %v573 = vadd.f32 %v303, %v522
    %v574 = vadd.f32 %v304, %v531
    %v575 = vadd.f32 %v305, %v540
    %v576 = vadd.f32 %v306, %v549
    %v577 = vadd.f32 %v173, 1.0
    %v578 = vadd.f32 %v175, 1.0
    %v579 = vadd.f32 %v177, 1.0
    %v580 = vadd.f32 %v179, 1.0
    %v581 = vadd.f32 %v181, 1.0
    %v582 = vadd.f32 %v183, 1.0
    %v583 = vadd.f32 %v185, 1.0
    %v584 = vadd.f32 %v187, 1.0
    %v585 = vadd.f32 %v189, 1.0
    %v586 = vadd.f32 %v191, 1.0
    %v587 = vadd.f32 %v193, 1.0
    %v588 = vadd.f32 %v195, 1.0
    %v589 = vadd.f32 %v197, 1.0
    %v590 = vadd.f32 %v199, 1.0
    %v591 = vadd.f32 %v201, 1.0
    %v592 = vadd.f32 %v203, 1.0
    %v593 = vadd.f32 %v205, 1.0
    %v594 = vadd.f32 %v207, 1.0
    %v595 = vadd.f32 %v209, 1.0
    %v596 = vadd.f32 %v211, 1.0
    %v597 = vadd.f32 %v213, 1.0
    %v598 = vadd.f32 %v215, 1.0
    %v599 = vadd.f32 %v217, 1.0
    %v600 = vadd.f32 %v219, 1.0
    %v601 = vadd.f32 %v221, 1.0
    %v602 = vadd.f32 %v223, 1.0
    %v603 = vadd.f32 %v225, 1.0
    %v604 = vrcp.pop %v577
    %v605 = vrcp.pop %v578
    %v606 = vrcp.pop %v579
    %v607 = vrcp.pop %v580
    %v608 = vrcp.pop %v581
    %v609 = vrcp.pop %v582
    %v610 = vrcp.pop %v583
    %v611 = vrcp.pop %v584
    %v612 = vrcp.pop %v585
    %v613 = vrcp.pop %v586
    %v614 = vrcp.pop %v587
    %v615 = vrcp.pop %v588
    %v616 = vrcp.pop %v589
    %v617 = vrcp.pop %v590
    %v618 = vrcp.pop %v591
    %v619 = vrcp.pop %v592
    %v620 = vrcp.pop %v593
    %v621 = vrcp.pop %v594
    %v622 = vrcp.pop %v595
    %v623 = vrcp.pop %v596
    %v624 = vrcp.pop %v597
    %v625 = vrcp.pop %v598
    %v626 = vrcp.pop %v599
    %v627 = vrcp.pop %v600
    %v628 = vrcp.pop %v601
    %v629 = vrcp.pop %v602
    %v630 = vrcp.pop %v603
    %vm631 = vcmp.ge.f32.partialorder %v64, 0.0
    %vm632 = vcmp.ge.f32.partialorder %v65, 0.0
    %vm633 = vcmp.ge.f32.partialorder %v66, 0.0
    %vm634 = vcmp.ge.f32.partialorder %v67, 0.0
    %vm635 = vcmp.ge.f32.partialorder %v68, 0.0
    %vm636 = vcmp.ge.f32.partialorder %v69, 0.0
    %vm637 = vcmp.ge.f32.partialorder %v70, 0.0
    %vm638 = vcmp.ge.f32.partialorder %v71, 0.0
    %vm639 = vcmp.ge.f32.partialorder %v72, 0.0
    %vm640 = vcmp.ge.f32.partialorder %v73, 0.0
    %vm641 = vcmp.ge.f32.partialorder %v74, 0.0
    %vm642 = vcmp.ge.f32.partialorder %v75, 0.0
    %vm643 = vcmp.ge.f32.partialorder %v76, 0.0
    %vm644 = vcmp.ge.f32.partialorder %v77, 0.0
    %vm645 = vcmp.ge.f32.partialorder %v78, 0.0
    %vm646 = vcmp.ge.f32.partialorder %v79, 0.0
    %vm647 = vcmp.ge.f32.partialorder %v80, 0.0
    %vm648 = vcmp.ge.f32.partialorder %v81, 0.0
    %vm649 = vcmp.ge.f32.partialorder %v82, 0.0
    %vm650 = vcmp.ge.f32.partialorder %v83, 0.0
    %vm651 = vcmp.ge.f32.partialorder %v84, 0.0
    %vm652 = vcmp.ge.f32.partialorder %v85, 0.0
    %vm653 = vcmp.ge.f32.partialorder %v86, 0.0
    %vm654 = vcmp.ge.f32.partialorder %v87, 0.0
    %vm655 = vcmp.ge.f32.partialorder %v88, 0.0
    %vm656 = vcmp.ge.f32.partialorder %v89, 0.0
    %vm657 = vcmp.ge.f32.partialorder %v90, 0.0
    %v658 = vmul.f32 %v173, %v604
    %v659 = vmul.f32 %v175, %v605
    %v660 = vmul.f32 %v177, %v606
    %v661 = vmul.f32 %v179, %v607
    %v662 = vmul.f32 %v181, %v608
    %v663 = vmul.f32 %v183, %v609
    %v664 = vmul.f32 %v185, %v610
    %v665 = vmul.f32 %v187, %v611
    %v666 = vmul.f32 %v189, %v612
    %v667 = vmul.f32 %v191, %v613
    %v668 = vmul.f32 %v193, %v614
    %v669 = vmul.f32 %v195, %v615
    %v670 = vmul.f32 %v197, %v616
    %v671 = vmul.f32 %v199, %v617
    %v672 = vmul.f32 %v201, %v618
    %v673 = vmul.f32 %v203, %v619
    %v674 = vmul.f32 %v205, %v620
    %v675 = vmul.f32 %v207, %v621
    %v676 = vmul.f32 %v209, %v622
    %v677 = vmul.f32 %v211, %v623
    %v678 = vmul.f32 %v213, %v624
    %v679 = vmul.f32 %v215, %v625
    %v680 = vmul.f32 %v217, %v626
    %v681 = vmul.f32 %v219, %v627
    %v682 = vmul.f32 %v221, %v628
    %v683 = vmul.f32 %v223, %v629
    %v684 = vmul.f32 %v225, %v630
    %v685 = vsel %vm631, %v604, %v658
    %v686 = vsel %vm632, %v605, %v659
    %v687 = vsel %vm633, %v606, %v660
    %v688 = vsel %vm634, %v607, %v661
    %v689 = vsel %vm635, %v608, %v662
    %v690 = vsel %vm636, %v609, %v663
    %v691 = vsel %vm637, %v610, %v664
    %v692 = vsel %vm638, %v611, %v665
    %v693 = vsel %vm639, %v612, %v666
    %v694 = vsel %vm640, %v613, %v667
    %v695 = vsel %vm641, %v614, %v668
    %v696 = vsel %vm642, %v615, %v669
    %v697 = vsel %vm643, %v616, %v670
    %v698 = vsel %vm644, %v617, %v671
    %v699 = vsel %vm645, %v618, %v672
    %v700 = vsel %vm646, %v619, %v673
    %v701 = vsel %vm647, %v620, %v674
    %v702 = vsel %vm648, %v621, %v675
    %v703 = vsel %vm649, %v622, %v676
    %v704 = vsel %vm650, %v623, %v677
    %v705 = vsel %vm651, %v624, %v678
    %v706 = vsel %vm652, %v625, %v679
    %v707 = vsel %vm653, %v626, %v680
    %v708 = vsel %vm654, %v627, %v681
    %v709 = vsel %vm655, %v628, %v682
    %v710 = vsel %vm656, %v629, %v683
    %v711 = vsel %vm657, %v630, %v684
    %v712 = vld [vmem:[#allocation7] sm:$0xff]
    %v713 = vadd.f32 %v550, %v551
    %v714 = vadd.f32 %v713, %v552
    %v715 = vadd.f32 %v714, %v553
    %v716 = vadd.f32 %v715, %v554
    %v717 = vadd.f32 %v716, %v555
    %v718 = vadd.f32 %v717, %v556
    %v719 = vadd.f32 %v718, %v557
    %v720 = vadd.f32 %v719, %v558
    %v721 = vadd.f32 %v720, %v559
    %v722 = vadd.f32 %v721, %v560
    %v723 = vadd.f32 %v722, %v561
    %v724 = vadd.f32 %v723, %v562
    %v725 = vadd.f32 %v724, %v563
    %v726 = vadd.f32 %v725, %v564
    %v727 = vadd.f32 %v726, %v565
    %v728 = vadd.f32 %v727, %v566
    %v729 = vadd.f32 %v728, %v567
    %v730 = vadd.f32 %v729, %v568
    %v731 = vadd.f32 %v730, %v569
    %v732 = vadd.f32 %v731, %v570
    %v733 = vadd.f32 %v732, %v571
    %v734 = vadd.f32 %v733, %v572
    %v735 = vadd.f32 %v734, %v573
    %v736 = vadd.f32 %v735, %v574
    %v737 = vadd.f32 %v736, %v575
    %v738 = vadd.f32 %v737, %v576
    %v739 = vadd.f32 %v712, %v738
    %740 = vst [vmem:[#allocation7] sm:$0xff] %v739
    %s741 = scalar_lea.vmem [#allocation7], 8
    %v742 = vld [vmem:[%s741] sm:$0xff]
    %v743 = vmul.f32 %v685, %v91
    %v744 = vmul.f32 %v686, %v92
    %v745 = vmul.f32 %v687, %v93
    %v746 = vmul.f32 %v688, %v94
    %v747 = vmul.f32 %v689, %v95
    %v748 = vmul.f32 %v690, %v96
    %v749 = vmul.f32 %v691, %v97
    %v750 = vmul.f32 %v692, %v98
    %v751 = vmul.f32 %v693, %v99
    %v752 = vmul.f32 %v694, %v100
    %v753 = vmul.f32 %v695, %v101
    %v754 = vmul.f32 %v696, %v102
    %v755 = vmul.f32 %v697, %v103
    %v756 = vmul.f32 %v698, %v104
    %v757 = vmul.f32 %v699, %v105
    %v758 = vmul.f32 %v700, %v106
    %v759 = vmul.f32 %v701, %v107
    %v760 = vmul.f32 %v702, %v108
    %v761 = vmul.f32 %v703, %v109
    %v762 = vmul.f32 %v704, %v110
    %v763 = vmul.f32 %v705, %v111
    %v764 = vmul.f32 %v706, %v112
    %v765 = vmul.f32 %v707, %v113
    %v766 = vmul.f32 %v708, %v114
    %v767 = vmul.f32 %v709, %v115
    %v768 = vmul.f32 %v710, %v116
    %v769 = vmul.f32 %v711, %v117
    %v770 = vadd.f32 %v743, %v744
    %v771 = vadd.f32 %v770, %v745
    %v772 = vadd.f32 %v771, %v746
    %v773 = vadd.f32 %v772, %v747
    %v774 = vadd.f32 %v773, %v748
    %v775 = vadd.f32 %v774, %v749
    %v776 = vadd.f32 %v775, %v750
    %v777 = vadd.f32 %v776, %v751
    %v778 = vadd.f32 %v777, %v752
    %v779 = vadd.f32 %v778, %v753
    %v780 = vadd.f32 %v779, %v754
    %v781 = vadd.f32 %v780, %v755
    %v782 = vadd.f32 %v781, %v756
    %v783 = vadd.f32 %v782, %v757
    %v784 = vadd.f32 %v783, %v758
    %v785 = vadd.f32 %v784, %v759
    %v786 = vadd.f32 %v785, %v760
    %v787 = vadd.f32 %v786, %v761
    %v788 = vadd.f32 %v787, %v762
    %v789 = vadd.f32 %v788, %v763
    %v790 = vadd.f32 %v789, %v764
    %v791 = vadd.f32 %v790, %v765
    %v792 = vadd.f32 %v791, %v766
    %v793 = vadd.f32 %v792, %v767
    %v794 = vadd.f32 %v793, %v768
    %v795 = vadd.f32 %v794, %v769
    %v796 = vadd.f32 %v742, %v795
    %797 = vst [vmem:[%s741] sm:$0xff] %v796
    %s798 = scalar_lea.vmem [#allocation7], 16
    %v799 = vld [vmem:[%s798] sm:$0xff]
    %v800 = vadd.f32 %v685, %v686
    %v801 = vadd.f32 %v800, %v687
    %v802 = vadd.f32 %v801, %v688
    %v803 = vadd.f32 %v802, %v689
    %v804 = vadd.f32 %v803, %v690
    %v805 = vadd.f32 %v804, %v691
    %v806 = vadd.f32 %v805, %v692
    %v807 = vadd.f32 %v806, %v693
    %v808 = vadd.f32 %v807, %v694
    %v809 = vadd.f32 %v808, %v695
    %v810 = vadd.f32 %v809, %v696
    %v811 = vadd.f32 %v810, %v697
    %v812 = vadd.f32 %v811, %v698
    %v813 = vadd.f32 %v812, %v699
    %v814 = vadd.f32 %v813, %v700
    %v815 = vadd.f32 %v814, %v701
    %v816 = vadd.f32 %v815, %v702
    %v817 = vadd.f32 %v816, %v703
    %v818 = vadd.f32 %v817, %v704
    %v819 = vadd.f32 %v818, %v705
    %v820 = vadd.f32 %v819, %v706
    %v821 = vadd.f32 %v820, %v707
    %v822 = vadd.f32 %v821, %v708
    %v823 = vadd.f32 %v822, %v709
    %v824 = vadd.f32 %v823, %v710
    %v825 = vadd.f32 %v824, %v711
    %v826 = vadd.f32 %v799, %v825
    %827 = vst [vmem:[%s798] sm:$0xff] %v826
    %s828 = scalar_lea.vmem [#allocation7], 24
    %v829 = vld [vmem:[%s828] sm:$0xff]
    %v830 = vadd.f32 %v91, %v92
    %v831 = vadd.f32 %v830, %v93
    %v832 = vadd.f32 %v831, %v94
    %v833 = vadd.f32 %v832, %v95
    %v834 = vadd.f32 %v833, %v96
    %v835 = vadd.f32 %v834, %v97
    %v836 = vadd.f32 %v835, %v98
    %v837 = vadd.f32 %v836, %v99
    %v838 = vadd.f32 %v837, %v100
    %v839 = vadd.f32 %v838, %v101
    %v840 = vadd.f32 %v839, %v102
    %v841 = vadd.f32 %v840, %v103
    %v842 = vadd.f32 %v841, %v104
    %v843 = vadd.f32 %v842, %v105
    %v844 = vadd.f32 %v843, %v106
    %v845 = vadd.f32 %v844, %v107
    %v846 = vadd.f32 %v845, %v108
    %v847 = vadd.f32 %v846, %v109
    %v848 = vadd.f32 %v847, %v110
    %v849 = vadd.f32 %v848, %v111
    %v850 = vadd.f32 %v849, %v112
    %v851 = vadd.f32 %v850, %v113
    %v852 = vadd.f32 %v851, %v114
    %v853 = vadd.f32 %v852, %v115
    %v854 = vadd.f32 %v853, %v116
    %v855 = vadd.f32 %v854, %v117
    %v856 = vadd.f32 %v829, %v855
    %857 = vst [vmem:[%s828] sm:$0xff] %v856
    // Predicated region
    $region22: #{tpu_custom_call.1} parent=1 // pred_check
      _
    $region23: #{tpu_custom_call.1} parent=1 // pred_check_branch
      %859 = sbr.rel (0) target = $region25
    $region24: #{tpu_custom_call.1} parent=1 // pred_region
      %861 = vsyncadd [#allocation4], 0
      %s862 = sshll.u32 [#allocation7], 4
      %s863 = int_to_ptr.vmem [resolvable:$true] %s862
      %s864 = sshll.u32 %s2, 4
      %s865 = int_to_ptr.hbm [resolvable:$true] %s864
      %870 = dma.vmem_to_hbm [thread:$0]  %s863, 512, %s865, [#allocation4], 128, 128, 8
    $region25: #{tpu_custom_call.1} parent=1 // pred_fallthru
      _
    // Predicated region
    $region26: #{tpu_custom_call.1} parent=1 // pred_check
      _
    $region27: #{tpu_custom_call.1} parent=1 // pred_check_branch
      %872 = sbr.rel (0) target = $region29
    $region28: #{tpu_custom_call.1} parent=1 // pred_region
      %874 = dma.done [#allocation4], 512
    $region29: #{tpu_custom_call.1} parent=1 // pred_fallthru
      _
    %875 = vsyncpa [#allocation3], 1
    %876 = vsyncpa [#allocation6], 1
    %877 = vsyncpa [#allocation4], 1

</llo_original>
